<compile_context>
chip_gen: v7x
topology: tpu7x:2x2x1
jax: 0.10.0
libtpu: 0.0.40
codegen_flags: <defaults>
</compile_context>

<pallas_src>
import math
import jax
import jax.numpy as jnp
from jax import lax
from jax.experimental import pallas as pl
from jax.experimental.pallas import tpu as pltpu

HIDDEN = 64      # logical hidden width (matches the PyTorch module)
LANE = 128       # lane-dense padded feature width used inside the kernel
TILE_B = 4096    # max batch rows per grid step


def _round_up(x, m):
    return ((x + m - 1) // m) * m


def _choose_tile_b(batch):
    """Batch tile: multiple of 128 (lane-dense output stores); >=4 grid steps when possible."""
    if batch <= 128:
        return batch                       # single block; full-dim block shapes are legal
    target = -(-batch // 4)                # aim for at least 4 grid steps (megacore + pipeline)
    return max(128, min(TILE_B, _round_up(target, 128)))


def qnetwork_kernel(x_ref, w1_ref, w2_ref, w3t_ref, b12_ref, b3_ref, out_ref):
    # x_ref:   (tile_b, state_size)            fp32/bf16 input tile (streamed over batch)
    # w1_ref:  (state_size, LANE)  bf16         w2_ref: (LANE, LANE) bf16
    # w3t_ref: (OUT_PAD, LANE)     bf16  (= W3^T, zero-padded rows/cols)
    # b12_ref: (8, LANE) fp32 (row0 = b1, row1 = b2);  b3_ref: (OUT_PAD, 1) fp32
    # out_ref: (OUT_PAD, tile_b) fp32  -- feature-major Q^T tile
    x = x_ref[...].astype(jnp.bfloat16)

    # fc1 + relu (batch-major, 128-lane padded hidden; padded lanes stay exactly 0)
    h = jnp.dot(x, w1_ref[...], preferred_element_type=jnp.float32) + b12_ref[0:1, :]
    h = jnp.maximum(h, 0.0).astype(jnp.bfloat16)

    # fc2 + relu
    h = jnp.dot(h, w2_ref[...], preferred_element_type=jnp.float32) + b12_ref[1:2, :]
    h = jnp.maximum(h, 0.0).astype(jnp.bfloat16)

    # fc3, emitted feature-major: Q^T = W3^T @ H^T, computed as an "NT" matmul
    # (contracting dims ((1,),(1,))) so no in-kernel transpose of the big activation.
    q_t = lax.dot_general(
        w3t_ref[...], h,
        dimension_numbers=(((1,), (1,)), ((), ())),
        preferred_element_type=jnp.float32,
    ) + b3_ref[...]
    out_ref[...] = q_t


def pack_qnetwork_params(params, state_size, action_size):
    """Zero-pad params into lane-dense slabs: bf16 weights, fp32 biases.

    Padded rows/cols are zero, so the extra hidden lanes remain exactly zero through the
    relu and contribute nothing to later matmuls; out rows >= action_size are discarded.
    """
    w1, b1, w2, b2, w3, b3 = params
    assert HIDDEN <= LANE
    assert w1.shape == (state_size, HIDDEN)
    assert w2.shape == (HIDDEN, HIDDEN)
    assert w3.shape == (HIDDEN, action_size)
    out_pad = _round_up(action_size, 8)

    w1p = jnp.zeros((state_size, LANE), jnp.bfloat16).at[:, :HIDDEN].set(w1.astype(jnp.bfloat16))
    w2p = jnp.zeros((LANE, LANE), jnp.bfloat16).at[:HIDDEN, :HIDDEN].set(w2.astype(jnp.bfloat16))
    w3t = jnp.zeros((out_pad, LANE), jnp.bfloat16).at[:action_size, :HIDDEN].set(
        w3.T.astype(jnp.bfloat16))
    b12 = jnp.zeros((8, LANE), jnp.float32)
    b12 = b12.at[0, :HIDDEN].set(b1.reshape(-1).astype(jnp.float32))
    b12 = b12.at[1, :HIDDEN].set(b2.reshape(-1).astype(jnp.float32))
    b3c = jnp.zeros((out_pad, 1), jnp.float32).at[:action_size, 0].set(
        b3.reshape(-1).astype(jnp.float32))
    return w1p, w2p, w3t, b12, b3c


def qnetwork_forward(x, params):
    batch, state_size = x.shape
    action_size = params[4].shape[1]     # w3: (HIDDEN, action_size)
    w1p, w2p, w3t, b12, b3c = pack_qnetwork_params(params, state_size, action_size)
    out_pad = w3t.shape[0]

    tile_b = _choose_tile_b(batch)
    grid = (pl.cdiv(batch, tile_b),)

    q_t = pl.pallas_call(
        qnetwork_kernel,
        out_shape=jax.ShapeDtypeStruct((out_pad, batch), jnp.float32),
        grid=grid,
        in_specs=[
            pl.BlockSpec((tile_b, state_size), lambda i: (i, 0)),   # x: streamed over batch
            pl.BlockSpec(w1p.shape, lambda i: (0, 0)),              # params: resident in VMEM
            pl.BlockSpec(w2p.shape, lambda i: (0, 0)),
            pl.BlockSpec(w3t.shape, lambda i: (0, 0)),
            pl.BlockSpec(b12.shape, lambda i: (0, 0)),
            pl.BlockSpec(b3c.shape, lambda i: (0, 0)),
        ],
        out_specs=pl.BlockSpec((out_pad, tile_b), lambda i: (0, i)),
        compiler_params=pltpu.CompilerParams(
            dimension_semantics=("parallel",),       # megacore sharding on multi-TC chips
        ),
    )(x, w1p, w2p, w3t, b12, b3c)

    # Q^T (out_pad, batch) -> (batch, action_size): tiny-array slice + transpose.
    return q_t[:action_size, :].T


def init_qnetwork_params(key, state_size, action_size):
    """Deterministic init mimicking PyTorch nn.Linear default U(-1/sqrt(fan_in), +1/sqrt(fan_in))."""
    dims = [(state_size, HIDDEN), (HIDDEN, HIDDEN), (HIDDEN, action_size)]
    params = []
    for i, (fan_in, fan_out) in enumerate(dims):
        kw, kb = jax.random.split(jax.random.fold_in(key, i))
        bound = 1.0 / math.sqrt(fan_in)
        w = jax.random.uniform(kw, (fan_in, fan_out), jnp.float32, -bound, bound)
        b = jax.random.uniform(kb, (1, fan_out), jnp.float32, -bound, bound)
        params += [w, b]
    return tuple(params)


if __name__ == "__main__":
    key = jax.random.PRNGKey(0)
    batch, state_size, action_size = 8, 16, 4

    k_x, k_p = jax.random.split(key)
    x = jax.random.normal(k_x, (batch, state_size), jnp.float32)
    params = init_qnetwork_params(k_p, state_size, action_size)

    out = qnetwork_forward(x, params)
    out = jax.block_until_ready(out)

    # Reference in plain JAX with matched bf16 inputs / fp32 accumulation.
    w1, b1, w2, b2, w3, b3 = params
    bf = lambda a: a.astype(jnp.bfloat16)
    h = jnp.maximum(jnp.dot(bf(x), bf(w1), preferred_element_type=jnp.float32) + b1, 0.0)
    h = jnp.maximum(jnp.dot(bf(h), bf(w2), preferred_element_type=jnp.float32) + b2, 0.0)
    ref = jnp.dot(bf(h), bf(w3), preferred_element_type=jnp.float32) + b3

    assert out.shape == (batch, action_size)
    assert jnp.allclose(out, ref, atol=1e-3, rtol=1e-3)

    print("KERNEL_OK")
</pallas_src>

<mosaic_0001>
module attributes {stable_mosaic.version = 11 : i64} {
  func.func @qnetwork_kernel(%arg0: i32, %arg1: memref<8x16xf32, #tpu.memory_space<vmem>>, %arg2: memref<16x128xbf16, #tpu.memory_space<vmem>>, %arg3: memref<128x128xbf16, #tpu.memory_space<vmem>>, %arg4: memref<8x128xbf16, #tpu.memory_space<vmem>>, %arg5: memref<8x128xf32, #tpu.memory_space<vmem>>, %arg6: memref<8x1xf32, #tpu.memory_space<vmem>>, %arg7: memref<8x8xf32, #tpu.memory_space<vmem>>) attributes {dimension_semantics = [#tpu.dimension_semantics<parallel>], iteration_bounds = array<i64: 1>, scalar_prefetch = 0 : i64, scratch_operands = 0 : i64, tpu.core_type = #tpu.core_type<tc>, window_params = [{transform_indices = @transform_0, window_bounds = array<i64: 8, 16>}, {pipeline_mode = #tpu.pipeline_mode<synchronous>, transform_indices = @transform_1, window_bounds = array<i64: 16, 128>}, {pipeline_mode = #tpu.pipeline_mode<synchronous>, transform_indices = @transform_2, window_bounds = array<i64: 128, 128>}, {pipeline_mode = #tpu.pipeline_mode<synchronous>, transform_indices = @transform_3, window_bounds = array<i64: 8, 128>}, {pipeline_mode = #tpu.pipeline_mode<synchronous>, transform_indices = @transform_4, window_bounds = array<i64: 8, 128>}, {pipeline_mode = #tpu.pipeline_mode<synchronous>, transform_indices = @transform_5, window_bounds = array<i64: 8, 1>}, {transform_indices = @transform_6, window_bounds = array<i64: 8, 8>}]} {
    %c0 = arith.constant 0 : index
    %c0_0 = arith.constant 0 : index
    %0 = vector.load %arg1[%c0, %c0_0] : memref<8x16xf32, #tpu.memory_space<vmem>>, vector<8x16xf32>
    %1 = arith.truncf %0 : vector<8x16xf32> to vector<8x16xbf16>
    %c0_1 = arith.constant 0 : index
    %c0_2 = arith.constant 0 : index
    %2 = vector.load %arg2[%c0_1, %c0_2] : memref<16x128xbf16, #tpu.memory_space<vmem>>, vector<16x128xbf16>
    %cst = arith.constant dense<0.000000e+00> : vector<8x128xf32>
    %3 = tpu.matmul %1, %2, %cst {dimension_numbers = #tpu.dot_dimension_numbers<[1], [0], [0], [1], [0, 0, 1, 1], [], []>} : vector<8x16xbf16>, vector<16x128xbf16>, vector<8x128xf32> -> vector<8x128xf32>
    %c0_3 = arith.constant 0 : index
    %c0_4 = arith.constant 0 : index
    %4 = vector.load %arg5[%c0_3, %c0_4] : memref<8x128xf32, #tpu.memory_space<vmem>>, vector<1x128xf32>
    %5 = vector.broadcast %4 : vector<1x128xf32> to vector<8x128xf32>
    %6 = arith.addf %3, %5 : vector<8x128xf32>
    %cst_5 = arith.constant 0.000000e+00 : f32
    %7 = vector.broadcast %cst_5 : f32 to vector<8x128xf32>
    %8 = arith.maximumf %6, %7 : vector<8x128xf32>
    %9 = arith.truncf %8 : vector<8x128xf32> to vector<8x128xbf16>
    %c0_6 = arith.constant 0 : index
    %c0_7 = arith.constant 0 : index
    %10 = vector.load %arg3[%c0_6, %c0_7] : memref<128x128xbf16, #tpu.memory_space<vmem>>, vector<128x128xbf16>
    %cst_8 = arith.constant dense<0.000000e+00> : vector<8x128xf32>
    %11 = tpu.matmul %9, %10, %cst_8 {dimension_numbers = #tpu.dot_dimension_numbers<[1], [0], [0], [1], [0, 0, 1, 1], [], []>} : vector<8x128xbf16>, vector<128x128xbf16>, vector<8x128xf32> -> vector<8x128xf32>
    %c1 = arith.constant 1 : index
    %c0_9 = arith.constant 0 : index
    %12 = vector.load %arg5[%c1, %c0_9] : memref<8x128xf32, #tpu.memory_space<vmem>>, vector<1x128xf32>
    %13 = vector.broadcast %12 : vector<1x128xf32> to vector<8x128xf32>
    %14 = arith.addf %11, %13 : vector<8x128xf32>
    %cst_10 = arith.constant 0.000000e+00 : f32
    %15 = vector.broadcast %cst_10 : f32 to vector<8x128xf32>
    %16 = arith.maximumf %14, %15 : vector<8x128xf32>
    %17 = arith.truncf %16 : vector<8x128xf32> to vector<8x128xbf16>
    %c0_11 = arith.constant 0 : index
    %c0_12 = arith.constant 0 : index
    %18 = vector.load %arg4[%c0_11, %c0_12] : memref<8x128xbf16, #tpu.memory_space<vmem>>, vector<8x128xbf16>
    %cst_13 = arith.constant dense<0.000000e+00> : vector<8x8xf32>
    %19 = tpu.matmul %18, %17, %cst_13 {dimension_numbers = #tpu.dot_dimension_numbers<[1], [1], [0], [0], [0, 0, 1, 0], [], []>} : vector<8x128xbf16>, vector<8x128xbf16>, vector<8x8xf32> -> vector<8x8xf32>
    %c0_14 = arith.constant 0 : index
    %c0_15 = arith.constant 0 : index
    %20 = vector.load %arg6[%c0_14, %c0_15] : memref<8x1xf32, #tpu.memory_space<vmem>>, vector<8x1xf32>
    %21 = vector.broadcast %20 : vector<8x1xf32> to vector<8x8xf32>
    %22 = arith.addf %19, %21 : vector<8x8xf32>
    %c0_16 = arith.constant 0 : index
    %c0_17 = arith.constant 0 : index
    %23 = vector.load %arg7[%c0_16, %c0_17] : memref<8x8xf32, #tpu.memory_space<vmem>>, vector<8x8xf32>
    tpu.vector_store %arg7[%c0_16, %c0_17], %22 {strides = array<i32>} : memref<8x8xf32, #tpu.memory_space<vmem>>, vector<8x8xf32>,
    return
  }
  func.func @transform_0(%arg0: i32) -> (i32, i32) {
    %c0_i32 = arith.constant 0 : i32
    %c0_i32_0 = arith.constant 0 : i32
    return %arg0, %c0_i32 : i32, i32
  }
  func.func @transform_1(%arg0: i32) -> (i32, i32) {
    %c0_i32 = arith.constant 0 : i32
    %c0_i32_0 = arith.constant 0 : i32
    %c0_i32_1 = arith.constant 0 : i32
    return %c0_i32, %c0_i32_0 : i32, i32
  }
  func.func @transform_2(%arg0: i32) -> (i32, i32) {
    %c0_i32 = arith.constant 0 : i32
    %c0_i32_0 = arith.constant 0 : i32
    %c0_i32_1 = arith.constant 0 : i32
    return %c0_i32, %c0_i32_0 : i32, i32
  }
  func.func @transform_3(%arg0: i32) -> (i32, i32) {
    %c0_i32 = arith.constant 0 : i32
    %c0_i32_0 = arith.constant 0 : i32
    %c0_i32_1 = arith.constant 0 : i32
    return %c0_i32, %c0_i32_0 : i32, i32
  }
  func.func @transform_4(%arg0: i32) -> (i32, i32) {
    %c0_i32 = arith.constant 0 : i32
    %c0_i32_0 = arith.constant 0 : i32
    %c0_i32_1 = arith.constant 0 : i32
    return %c0_i32, %c0_i32_0 : i32, i32
  }
  func.func @transform_5(%arg0: i32) -> (i32, i32) {
    %c0_i32 = arith.constant 0 : i32
    %c0_i32_0 = arith.constant 0 : i32
    %c0_i32_1 = arith.constant 0 : i32
    return %c0_i32, %c0_i32_0 : i32, i32
  }
  func.func @transform_6(%arg0: i32) -> (i32, i32) {
    %c0_i32 = arith.constant 0 : i32
    %c0_i32_0 = arith.constant 0 : i32
    return %c0_i32, %arg0 : i32, i32
  }
}

</mosaic_0001>

<llo_original>
// kernel: tpu_custom_call.1
$region0: #{tpu_custom_call.1}
  #allocation0 [shape = 'u32[]', space=smem, size = 0x4, offset = 0x4, fixed_abs, tag = 'smem constant byte address 0x4 - core index']
  #allocation1 [shape = 'u32[144,128]{1,0:T(1,128)}', space=vmem, size = 0x12000, scoped, tag = 'internal scratch']
  %s0 = inlined_call_operand.vmem [shape: f32[8,16], index: 0, kind: input, shape index: {}]
  %s1 = inlined_call_operand.hbm [shape: bf16[16,128], index: 1, kind: input, shape index: {}]
  %s2 = inlined_call_operand.hbm [shape: bf16[128,128], index: 2, kind: input, shape index: {}]
  %s3 = inlined_call_operand.vmem [shape: bf16[8,128], index: 3, kind: input, shape index: {}]
  %s4 = inlined_call_operand.vmem [shape: f32[8,128], index: 4, kind: input, shape index: {}]
  %s5 = inlined_call_operand.vmem [shape: f32[8,1], index: 5, kind: input, shape index: {}]
  %s6 = inlined_call_operand.hbm [shape: f32[8,8], index: 6, kind: output, shape index: {}]
  %s7 = sld [smem:[#allocation0]]
  $region42: #{tpu_custom_call.1} parent=0
    _
  %s9 = ssub.s32 1, %s7
  %s10 = scalar_select 0, %s9, %s7
  $region1: #{tpu_custom_call.1} parent=0
    #allocation2 [shape = 'u8[4096]{0}', space=vmem, size = 0x1000, scoped, tag = 'input window, operand 1, single buffered']
    #allocation3 [shape = 's32[1]{0}', space=sflag, size = 0x4, scoped, tag = 'scoped memory for tpu_custom_call.1']
    #allocation4 [shape = 's32[1]{0}', space=sflag, size = 0x4, scoped, tag = 'scoped memory for tpu_custom_call.1']
    #allocation5 [shape = 'u8[32768]{0}', space=vmem, size = 0x8000, scoped, tag = 'input window, operand 2, single buffered']
    #allocation6 [shape = 's32[1]{0}', space=sflag, size = 0x4, scoped, tag = 'scoped memory for tpu_custom_call.1']
    #allocation7 [shape = 'u8[4096]{0}', space=vmem, size = 0x1000, scoped, tag = 'output window, operand 0, single buffered']
    %11 = vsyncpa [#allocation3], 0
    %12 = vsyncpa [#allocation6], 0
    %13 = vsyncpa [#allocation4], 0
    // Predicated region
    $region2: #{tpu_custom_call.1} parent=1 // pred_check
      _
    $region3: #{tpu_custom_call.1} parent=1 // pred_check_branch
      %15 = sbr.rel (0) target = $region5
    $region4: #{tpu_custom_call.1} parent=1 // pred_region
      _
    $region5: #{tpu_custom_call.1} parent=1 // pred_fallthru
      _
    // Predicated region
    $region6: #{tpu_custom_call.1} parent=1 // pred_check
      _
    $region7: #{tpu_custom_call.1} parent=1 // pred_check_branch
      %17 = sbr.rel (0) target = $region9
    $region8: #{tpu_custom_call.1} parent=1 // pred_region
      %s19 = ssub.s32 128, 128
      %20 = vsyncadd [#allocation3], %s19
      %s21 = sshll.u32 [#allocation2], 4
      %s22 = int_to_ptr.vmem [resolvable:$true] %s21
      %27 = dma.hbm_to_vmem [thread:$0]  %s1, 128, %s22, [#allocation3], 64, 64, 4
    $region9: #{tpu_custom_call.1} parent=1 // pred_fallthru
      _
    // Predicated region
    $region10: #{tpu_custom_call.1} parent=1 // pred_check
      _
    $region11: #{tpu_custom_call.1} parent=1 // pred_check_branch
      %29 = sbr.rel (0) target = $region13
    $region12: #{tpu_custom_call.1} parent=1 // pred_region
      %s31 = ssub.s32 1024, 1024
      %32 = vsyncadd [#allocation6], %s31
      %s33 = sshll.u32 [#allocation5], 4
      %s34 = int_to_ptr.vmem [resolvable:$true] %s33
      %39 = dma.hbm_to_vmem [thread:$0]  %s2, 1024, %s34, [#allocation6], 64, 64, 4
    $region13: #{tpu_custom_call.1} parent=1 // pred_fallthru
      _
    // Predicated region
    $region14: #{tpu_custom_call.1} parent=1 // pred_check
      _
    $region15: #{tpu_custom_call.1} parent=1 // pred_check_branch
      %41 = sbr.rel (0) target = $region17
    $region16: #{tpu_custom_call.1} parent=1 // pred_region
      _
    $region17: #{tpu_custom_call.1} parent=1 // pred_fallthru
      _
    // Predicated region
    $region18: #{tpu_custom_call.1} parent=1 // pred_check
      _
    $region19: #{tpu_custom_call.1} parent=1 // pred_check_branch
      %43 = sbr.rel (0) target = $region21
    $region20: #{tpu_custom_call.1} parent=1 // pred_region
      _
    $region21: #{tpu_custom_call.1} parent=1 // pred_fallthru
      _
    // Predicated region
    $region22: #{tpu_custom_call.1} parent=1 // pred_check
      _
    $region23: #{tpu_custom_call.1} parent=1 // pred_check_branch
      %45 = sbr.rel (0) target = $region25
    $region24: #{tpu_custom_call.1} parent=1 // pred_region
      _
    $region25: #{tpu_custom_call.1} parent=1 // pred_fallthru
      _
    // Predicated region
    $region26: #{tpu_custom_call.1} parent=1 // pred_check
      _
    $region27: #{tpu_custom_call.1} parent=1 // pred_check_branch
      %47 = sbr.rel (0) target = $region29
    $region28: #{tpu_custom_call.1} parent=1 // pred_region
      %48 = dma.done [#allocation3], 128
    $region29: #{tpu_custom_call.1} parent=1 // pred_fallthru
      _
    // Predicated region
    $region30: #{tpu_custom_call.1} parent=1 // pred_check
      _
    $region31: #{tpu_custom_call.1} parent=1 // pred_check_branch
      %50 = sbr.rel (0) target = $region33
    $region32: #{tpu_custom_call.1} parent=1 // pred_region
      %51 = dma.done [#allocation6], 1024
    $region33: #{tpu_custom_call.1} parent=1 // pred_fallthru
      _
    %v53 = vld [vmem:[%s0] sm:$0xff]
    %v54 = vpack.c.bf16 %v53, %v53
    %v55 = vld [vmem:[#allocation2] sm:$0xf]
    %v56 = vld [vmem:[#allocation2 + $0x4] sm:$0xf]
    %v57 = vld [vmem:[%s4] sm:$0x1]
    %v58 = vlaneseq
    %v59 = vshrl.u32 %v58, 7
    %v60 = vsub.s32 0, %v59
    %v61 = vrot.slane %v57, %v60
    %v64 = vunpack.c.l.b16 %v55
    %v65 = vunpack.c.l.b16 %v56
    %v66 = vpack.c.b16 %v65, %v64
    %vm68 = vcmask 130048
    %v70 = vsel %vm68, %v54, 0
    %72 = vmatprep.subr.bf16.mxu0 0
    %73 = vmatpush1.bf16.msra.mxu0 %v66
    %74 = vmatprep.subr.bf16.mxu0 0
    %75 = vmatpush1.bf16.msra.mxu0 0
    %76 = vmatprep.subr.bf16.mxu0 0
    %77 = vmatpush1.bf16.msra.mxu0 0
    %78 = vmatprep.subr.bf16.mxu0 0
    %79 = vmatpush1.bf16.msra.mxu0 0
    %80 = vmatprep.subr.bf16.mxu0 0
    %81 = vmatpush1.bf16.msra.mxu0 0
    %82 = vmatprep.subr.bf16.mxu0 0
    %83 = vmatpush1.bf16.msra.mxu0 0
    %84 = vmatprep.subr.bf16.mxu0 0
    %85 = vmatpush1.bf16.msra.mxu0 0
    %86 = vmatprep.subr.bf16.mxu0 0
    %87 = vmatpush1.bf16.msra.mxu0 0
    %88 = vmatprep.subr.bf16.mxu0 0
    %89 = vmatpush1.bf16.msra.mxu0 0
    %90 = vmatprep.subr.bf16.mxu0 0
    %91 = vmatpush1.bf16.msra.mxu0 0
    %92 = vmatprep.subr.bf16.mxu0 0
    %93 = vmatpush1.bf16.msra.mxu0 0
    %94 = vmatprep.subr.bf16.mxu0 0
    %95 = vmatpush1.bf16.msra.mxu0 0
    %96 = vmatprep.subr.bf16.mxu0 0
    %97 = vmatpush1.bf16.msra.mxu0 0
    %98 = vmatprep.subr.bf16.mxu0 0
    %99 = vmatpush1.bf16.msra.mxu0 0
    %100 = vmatprep.subr.bf16.mxu0 0
    %101 = vmatpush1.bf16.msra.mxu0 0
    %102 = vmatprep.subr.bf16.mxu0 0
    %103 = vmatpush1.bf16.msra.mxu0 0
    %104 = vmatprep.mubr.bf16.mxu0 0
    %105 = vmatmul.mubr.bf16.gmra.mrb[0].mxu0 %v70
    %v106 = vpop.f32.mrb[0].mxu0
    %v107 = vadd.f32 %v61, %v106
    %v108 = vpop.f32.mrb[0].mxu0
    %v109 = vpop.f32.mrb[0].mxu0
    %v110 = vpop.f32.mrb[0].mxu0
    %111 = vdwg.mxu0
    %v112 = vmax.f32 %v107, 0.0
    %v113 = vpack.c.bf16 %v112, %v112
    %v114 = vld [vmem:[#allocation5] sm:$0xf]
    %v115 = vld [vmem:[#allocation5 + $0x4] sm:$0xf]
    %v116 = vld [vmem:[#allocation5 + $0x8] sm:$0xf]
    %v117 = vld [vmem:[#allocation5 + $0xc] sm:$0xf]
    %v118 = vld [vmem:[#allocation5 + $0x10] sm:$0xf]
    %v119 = vld [vmem:[#allocation5 + $0x14] sm:$0xf]
    %v120 = vld [vmem:[#allocation5 + $0x18] sm:$0xf]
    %v121 = vld [vmem:[#allocation5 + $0x1c] sm:$0xf]
    %v122 = vld [vmem:[#allocation5 + $0x20] sm:$0xf]
    %v123 = vld [vmem:[#allocation5 + $0x24] sm:$0xf]
    %v124 = vld [vmem:[#allocation5 + $0x28] sm:$0xf]
    %v125 = vld [vmem:[#allocation5 + $0x2c] sm:$0xf]
    %v126 = vld [vmem:[#allocation5 + $0x30] sm:$0xf]
    %v127 = vld [vmem:[#allocation5 + $0x34] sm:$0xf]
    %v128 = vld [vmem:[#allocation5 + $0x38] sm:$0xf]
    %v129 = vld [vmem:[#allocation5 + $0x3c] sm:$0xf]
    %v130 = vld [vmem:[%s4 + $0x1] sm:$0x1]
    %v131 = vlaneseq
    %v132 = vshrl.u32 %v131, 7
    %v133 = vsub.s32 0, %v132
    %v134 = vrot.slane %v130, %v133
    %v151 = vunpack.c.l.b16 %v114
    %v152 = vunpack.c.l.b16 %v115
    %v153 = vunpack.c.l.b16 %v116
    %v154 = vunpack.c.l.b16 %v117
    %v155 = vunpack.c.l.b16 %v118
    %v156 = vunpack.c.l.b16 %v119
    %v157 = vunpack.c.l.b16 %v120
    %v158 = vunpack.c.l.b16 %v121
    %v159 = vunpack.c.l.b16 %v122
    %v160 = vunpack.c.l.b16 %v123
    %v161 = vunpack.c.l.b16 %v124
    %v162 = vunpack.c.l.b16 %v125
    %v163 = vunpack.c.l.b16 %v126
    %v164 = vunpack.c.l.b16 %v127
    %v165 = vunpack.c.l.b16 %v128
    %v166 = vunpack.c.l.b16 %v129
    %v167 = vpack.c.b16 %v152, %v151
    %v168 = vpack.c.b16 %v154, %v153
    %v169 = vpack.c.b16 %v156, %v155
    %v170 = vpack.c.b16 %v158, %v157
    %v171 = vpack.c.b16 %v160, %v159
    %v172 = vpack.c.b16 %v162, %v161
    %v173 = vpack.c.b16 %v164, %v163
    %v174 = vpack.c.b16 %v166, %v165
    %183 = vmatprep.subr.bf16.mxu0 0
    %184 = vmatpush1.bf16.msra.mxu0 %v167
    %185 = vmatprep.subr.bf16.mxu0 0
    %186 = vmatpush1.bf16.msra.mxu0 %v168
    %187 = vmatprep.subr.bf16.mxu0 0
    %188 = vmatpush1.bf16.msra.mxu0 %v169
    %189 = vmatprep.subr.bf16.mxu0 0
    %190 = vmatpush1.bf16.msra.mxu0 %v170
    %191 = vmatprep.subr.bf16.mxu0 0
    %192 = vmatpush1.bf16.msra.mxu0 %v171
    %193 = vmatprep.subr.bf16.mxu0 0
    %194 = vmatpush1.bf16.msra.mxu0 %v172
    %195 = vmatprep.subr.bf16.mxu0 0
    %196 = vmatpush1.bf16.msra.mxu0 %v173
    %197 = vmatprep.subr.bf16.mxu0 0
    %198 = vmatpush1.bf16.msra.mxu0 %v174
    %199 = vmatprep.subr.bf16.mxu0 0
    %200 = vmatpush1.bf16.msra.mxu0 0
    %201 = vmatprep.subr.bf16.mxu0 0
    %202 = vmatpush1.bf16.msra.mxu0 0
    %203 = vmatprep.subr.bf16.mxu0 0
    %204 = vmatpush1.bf16.msra.mxu0 0
    %205 = vmatprep.subr.bf16.mxu0 0
    %206 = vmatpush1.bf16.msra.mxu0 0
    %207 = vmatprep.subr.bf16.mxu0 0
    %208 = vmatpush1.bf16.msra.mxu0 0
    %209 = vmatprep.subr.bf16.mxu0 0
    %210 = vmatpush1.bf16.msra.mxu0 0
    %211 = vmatprep.subr.bf16.mxu0 0
    %212 = vmatpush1.bf16.msra.mxu0 0
    %213 = vmatprep.subr.bf16.mxu0 0
    %214 = vmatpush1.bf16.msra.mxu0 0
    %215 = vmatprep.mubr.bf16.mxu0 0
    %216 = vmatmul.mubr.bf16.gmra.mrb[0].mxu0 %v113
    %v217 = vpop.f32.mrb[0].mxu0
    %v218 = vadd.f32 %v134, %v217
    %v219 = vpop.f32.mrb[0].mxu0
    %v220 = vpop.f32.mrb[0].mxu0
    %v221 = vpop.f32.mrb[0].mxu0
    %222 = vdwg.mxu0
    %v223 = vmax.f32 %v218, 0.0
    %v224 = vpack.c.bf16 %v223, %v223
    %v225 = vld [vmem:[%s3] sm:$0xf]
    %v226 = vld [vmem:[%s5] sm:$0xff]
    %228 = vset.pattern.permute.xlu0 0
    %229 = vperm.xlu0 %228, %v226
    %v230 = vpop.permute.xlu0 %229
    %232 = vmatprep.subr.bf16.mxu0 0
    %233 = vmatpush1.bf16.xpose.msra.mxu0 %v224
    %234 = vmatprep.subr.bf16.mxu0 0
    %235 = vmatpush1.bf16.xpose.msra.mxu0 0
    %236 = vmatprep.subr.bf16.mxu0 0
    %237 = vmatpush1.bf16.xpose.msra.mxu0 0
    %238 = vmatprep.subr.bf16.mxu0 0
    %239 = vmatpush1.bf16.xpose.msra.mxu0 0
    %240 = vmatprep.subr.bf16.mxu0 0
    %241 = vmatpush1.bf16.xpose.msra.mxu0 0
    %242 = vmatprep.subr.bf16.mxu0 0
    %243 = vmatpush1.bf16.xpose.msra.mxu0 0
    %244 = vmatprep.subr.bf16.mxu0 0
    %245 = vmatpush1.bf16.xpose.msra.mxu0 0
    %246 = vmatprep.subr.bf16.mxu0 0
    %247 = vmatpush1.bf16.xpose.msra.mxu0 0
    %248 = vmatprep.subr.bf16.mxu0 0
    %249 = vmatpush1.bf16.xpose.msra.mxu0 0
    %250 = vmatprep.subr.bf16.mxu0 0
    %251 = vmatpush1.bf16.xpose.msra.mxu0 0
    %252 = vmatprep.subr.bf16.mxu0 0
    %253 = vmatpush1.bf16.xpose.msra.mxu0 0
    %254 = vmatprep.subr.bf16.mxu0 0
    %255 = vmatpush1.bf16.xpose.msra.mxu0 0
    %256 = vmatprep.subr.bf16.mxu0 0
    %257 = vmatpush1.bf16.xpose.msra.mxu0 0
    %258 = vmatprep.subr.bf16.mxu0 0
    %259 = vmatpush1.bf16.xpose.msra.mxu0 0
    %260 = vmatprep.subr.bf16.mxu0 0
    %261 = vmatpush1.bf16.xpose.msra.mxu0 0
    %262 = vmatprep.subr.bf16.mxu0 0
    %263 = vmatpush1.bf16.xpose.msra.mxu0 0
    %264 = vmatprep.mubr.bf16.mxu0 0
    %265 = vmatmul.mubr.bf16.gmra.mrb[0].mxu0 %v225
    %v266 = vpop.f32.mrb[0].mxu0
    %v267 = vadd.f32 %v230, %v266
    %v268 = vpop.f32.mrb[0].mxu0
    %v269 = vpop.f32.mrb[0].mxu0
    %v270 = vpop.f32.mrb[0].mxu0
    %271 = vdwg.mxu0
    %vm272 = vcmask 64512
    %273 = vst.msk [vmem:[#allocation7] sm:$0xff] %vm272, %v267
    // Predicated region
    $region34: #{tpu_custom_call.1} parent=1 // pred_check
      _
    $region35: #{tpu_custom_call.1} parent=1 // pred_check_branch
      %275 = sbr.rel (0) target = $region37
    $region36: #{tpu_custom_call.1} parent=1 // pred_region
      %s277 = ssub.s32 128, 128
      %278 = vsyncadd [#allocation4], %s277
      %s280 = sshll.u32 [#allocation7], 4
      %s281 = int_to_ptr.vmem [resolvable:$true] %s280
      %283 = dma.vmem_to_hbm [thread:$0]  %s281, 128, %s6, [#allocation4]
    $region37: #{tpu_custom_call.1} parent=1 // pred_fallthru
      _
    // Predicated region
    $region38: #{tpu_custom_call.1} parent=1 // pred_check
      _
    $region39: #{tpu_custom_call.1} parent=1 // pred_check_branch
      %285 = sbr.rel (0) target = $region41
    $region40: #{tpu_custom_call.1} parent=1 // pred_region
      %286 = dma.done [#allocation4], 128
    $region41: #{tpu_custom_call.1} parent=1 // pred_fallthru
      _
    %287 = vsyncpa [#allocation3], 1
    %288 = vsyncpa [#allocation6], 1
    %289 = vsyncpa [#allocation4], 1

</llo_original>
